<compile_context>
chip_gen: v6e
topology: v6e:2x2x1
jax: 0.10.0
libtpu: 0.0.40
codegen_flags: <defaults>
</compile_context>

<pallas_src>
import functools

import jax
import jax.numpy as jnp
from jax import lax
from jax.experimental import pallas as pl
from jax.experimental.pallas import tpu as pltpu

_LANE = 128                      # vreg lane width -> batch-tile granularity
_MAX_BLOCK_B = 16384             # cap on batch-tile columns (lane-padded input tile)
_BYTES_PER_COL = 2048            # conservative VMEM bytes per batch column
_VMEM_BUDGET = 32 * 1024 * 1024  # valid scoped limit on v5e/v6e/v7x


def _round_up(n, m):
    return ((n + m - 1) // m) * m


def _tpu_vmem_and_cores():
    """Best-effort hardware query; falls back to safe defaults."""
    vmem = 64 * 1024 * 1024
    cores = 1
    try:
        info = pltpu.get_tpu_info()
        vmem = int(getattr(info, "vmem_capacity_bytes", vmem) or vmem)
        for attr in ("num_cores", "core_count", "num_tensorcores",
                     "tensorcores_per_chip"):
            v = getattr(info, attr, None)
            if v:
                cores = int(v)
                break
    except Exception:
        pass
    if cores == 1:
        try:
            kind = jax.devices()[0].device_kind.lower()
            if "7" in kind:          # v7x-class chips: 2 TensorCores / chip
                cores = 2
        except Exception:
            pass
    return vmem, cores


def _pick_block_b(B):
    """Largest batch tile that fits the VMEM budget; only split further when
    multiple TensorCores exist (>=2 pipelined steps per core), never just to
    manufacture extra grid steps on single-TC chips."""
    vmem, cores = _tpu_vmem_and_cores()
    budget = min(_VMEM_BUDGET, vmem // 2)
    fits = max(_LANE, (budget // _BYTES_PER_COL) // _LANE * _LANE)
    cap = min(_MAX_BLOCK_B, fits)
    b_ceil = _round_up(B, _LANE)
    if cores > 1 and b_ceil > cores * _LANE:
        per_step = _round_up(-(-b_ceil // (2 * cores)), _LANE)
        return min(cap, max(_LANE, per_step))
    return min(cap, b_ceil)


def _mlp_kernel(x_ref,
                w1_ref, b1_ref,
                w2_ref, b2_ref,
                w3_ref, b3_ref,
                w4_ref, b4_ref,
                o_ref, *, compute_dtype):
    cd = compute_dtype
    x = x_ref[...].astype(cd)                                    # (Bt, C)
    # Layer 1: (32, C) . (Bt, C)^T -> (32, Bt); transpose folded into the MXU op.
    h = lax.dot_general(w1_ref[...], x, (((1,), (1,)), ((), ())),
                        preferred_element_type=jnp.float32)
    h = jnp.maximum(h + b1_ref[...], 0.0)                        # (32, Bt) f32
    h = jnp.dot(w2_ref[...], h.astype(cd), preferred_element_type=jnp.float32)
    h = jnp.maximum(h + b2_ref[...], 0.0)                        # (16, Bt)
    h = jnp.dot(w3_ref[...], h.astype(cd), preferred_element_type=jnp.float32)
    h = jnp.maximum(h + b3_ref[...], 0.0)                        # (8, Bt)
    h = jnp.dot(w4_ref[...], h.astype(cd), preferred_element_type=jnp.float32)
    o_ref[...] = (h + b4_ref[...]).astype(o_ref.dtype)           # (M, Bt) lane-dense


@functools.partial(jax.jit, static_argnames=("block_b", "compute_dtype"))
def _forward(x, params, *, block_b, compute_dtype):
    B, C = x.shape
    M = params["w4"].shape[0]
    n_blocks = -(-B // block_b)                                  # cdiv

    cd = jnp.dtype(compute_dtype)
    # Cast weights once (tiny); biases stay f32 (added post-accumulation).
    w = {k: (v.astype(cd) if k.startswith("w") else v) for k, v in params.items()}

    def whole(arr):
        nd = arr.ndim
        return pl.BlockSpec(arr.shape, lambda i, _nd=nd: (0,) * _nd)

    in_specs = [
        pl.BlockSpec((block_b, C), lambda i: (i, 0)),            # natural-layout x tile
        whole(w["w1"]), whole(w["b1"]),
        whole(w["w2"]), whole(w["b2"]),
        whole(w["w3"]), whole(w["b3"]),
        whole(w["w4"]), whole(w["b4"]),
    ]
    out_spec = pl.BlockSpec((M, block_b), lambda i: (0, i))

    flops = 2 * B * (C * 32 + 32 * 16 + 16 * 8 + 8 * M)
    weight_bytes = sum(int(v.size) * v.dtype.itemsize for v in w.values())
    bytes_accessed = int(x.size) * x.dtype.itemsize + B * M * 4 + weight_bytes

    vmem_limit = int(min(_VMEM_BUDGET,
                         max(4 << 20, 2 * _BYTES_PER_COL * block_b)))

    out_t = pl.pallas_call(
        functools.partial(_mlp_kernel, compute_dtype=cd),
        out_shape=jax.ShapeDtypeStruct((M, B), x.dtype),
        grid_spec=pltpu.PrefetchScalarGridSpec(
            num_scalar_prefetch=0,
            grid=(n_blocks,),
            in_specs=in_specs,
            out_specs=out_spec,
        ),
        compiler_params=pltpu.CompilerParams(
            dimension_semantics=("parallel",),
            vmem_limit_bytes=vmem_limit),
        cost_estimate=pl.CostEstimate(
            flops=flops, transcendentals=0, bytes_accessed=bytes_accessed),
    )(x, w["w1"], w["b1"], w["w2"], w["b2"], w["w3"], w["b3"], w["w4"], w["b4"])

    # (M, B) feature-major -> (B, M).  Tiny (M rows); kept only to preserve the
    # PyTorch (batch, metriccount) API.
    # TODO(synk): drop this transpose if the consumer can take feature-major output.
    return out_t.T


def inverse_model_forward(x, params, block_b=None, compute_dtype=jnp.bfloat16):
    """Forward pass of InverseModel.  x: (B, inputchannel) f32.
    params: w1..w4 as (out_features, in_features), b1..b4 as (out_features, 1)."""
    B = x.shape[0]
    if block_b is None:
        block_b = _pick_block_b(B)
    block_b = max(_LANE, _round_up(int(block_b), _LANE))
    return _forward(x, params, block_b=block_b, compute_dtype=compute_dtype)


def init_params(key, inputchannel, metriccount):
    """Matches PyTorch _init_weights: kaiming_normal_(fan_out, relu) -> std =
    sqrt(2/fan_out); biases zero."""
    dims = [(inputchannel, 32), (32, 16), (16, 8), (8, metriccount)]
    params = {}
    keys = jax.random.split(key, len(dims))
    for idx, ((fan_in, fan_out), k) in enumerate(zip(dims, keys), start=1):
        std = (2.0 / fan_out) ** 0.5
        params[f"w{idx}"] = jax.random.normal(k, (fan_out, fan_in), jnp.float32) * std
        params[f"b{idx}"] = jnp.zeros((fan_out, 1), jnp.float32)
    return params


def reference_forward(x, params, compute_dtype=jnp.float32):
    """Pure-JAX reference replicating the kernel's precision policy."""
    cd = jnp.dtype(compute_dtype)
    h = x
    for i in range(1, 5):
        w = params[f"w{i}"].astype(cd)
        h = jnp.dot(h.astype(cd), w.T, preferred_element_type=jnp.float32)
        h = h + params[f"b{i}"].T
        if i < 4:
            h = jnp.maximum(h, 0.0)
    return h


if __name__ == "__main__":
    key = jax.random.PRNGKey(0)
    k_params, k_x1, k_x2 = jax.random.split(key, 3)

    inputchannel = 16
    metriccount = 4
    params = init_params(k_params, inputchannel, metriccount)

    # 1) Small batch, exact f32 path (single edge block, batch < tile).
    x_small = jax.random.normal(k_x1, (8, inputchannel), jnp.float32)
    out_small = jax.block_until_ready(
        inverse_model_forward(x_small, params, compute_dtype=jnp.float32))
    ref_small = reference_forward(x_small, params)
    assert out_small.shape == (8, metriccount), out_small.shape
    assert jnp.allclose(out_small, ref_small, atol=1e-4, rtol=1e-4), \
        "small-batch f32 mismatch vs reference"

    # 2) Ragged batch with a forced 3-step grid (exercises cdiv grid + masked
    #    tail reads/writes without any wrapper-side padding), exact f32 path.
    x_big = jax.random.normal(k_x2, (333, inputchannel), jnp.float32)
    out_big = jax.block_until_ready(
        inverse_model_forward(x_big, params, block_b=128, compute_dtype=jnp.float32))
    ref_big = reference_forward(x_big, params)
    assert out_big.shape == (333, metriccount), out_big.shape
    assert jnp.allclose(out_big, ref_big, atol=1e-4, rtol=1e-4), \
        "ragged-batch f32 mismatch vs reference"

    # 3) Default bf16-MXU path: tight vs a matching bf16 reference, loose vs f32.
    out_bf16 = jax.block_until_ready(inverse_model_forward(x_big, params))
    ref_bf16 = reference_forward(x_big, params, compute_dtype=jnp.bfloat16)
    assert out_bf16.shape == (333, metriccount), out_bf16.shape
    assert jnp.allclose(out_bf16, ref_bf16, atol=2e-3, rtol=2e-3), \
        "bf16 kernel mismatch vs bf16 reference"
    assert jnp.allclose(out_bf16, ref_big, atol=3e-1, rtol=1e-1), \
        "bf16 kernel grossly off vs f32 reference"

    print("KERNEL_OK")
</pallas_src>

<mosaic_0001>
module attributes {stable_mosaic.version = 11 : i64} {
  func.func @_mlp_kernel(%arg0: i32, %arg1: memref<128x16xf32, #tpu.memory_space<vmem>>, %arg2: memref<32x16xf32, #tpu.memory_space<vmem>>, %arg3: memref<32x1xf32, #tpu.memory_space<vmem>>, %arg4: memref<16x32xf32, #tpu.memory_space<vmem>>, %arg5: memref<16x1xf32, #tpu.memory_space<vmem>>, %arg6: memref<8x16xf32, #tpu.memory_space<vmem>>, %arg7: memref<8x1xf32, #tpu.memory_space<vmem>>, %arg8: memref<4x8xf32, #tpu.memory_space<vmem>>, %arg9: memref<4x1xf32, #tpu.memory_space<vmem>>, %arg10: memref<4x128xf32, #tpu.memory_space<vmem>>) attributes {dimension_semantics = [#tpu.dimension_semantics<parallel>], iteration_bounds = array<i64: 1>, scalar_prefetch = 0 : i64, scratch_operands = 0 : i64, tpu.core_type = #tpu.core_type<tc>, window_params = [{transform_indices = @transform_0, window_bounds = array<i64: 128, 16>}, {pipeline_mode = #tpu.pipeline_mode<synchronous>, transform_indices = @transform_1, window_bounds = array<i64: 32, 16>}, {pipeline_mode = #tpu.pipeline_mode<synchronous>, transform_indices = @transform_2, window_bounds = array<i64: 32, 1>}, {pipeline_mode = #tpu.pipeline_mode<synchronous>, transform_indices = @transform_3, window_bounds = array<i64: 16, 32>}, {pipeline_mode = #tpu.pipeline_mode<synchronous>, transform_indices = @transform_4, window_bounds = array<i64: 16, 1>}, {pipeline_mode = #tpu.pipeline_mode<synchronous>, transform_indices = @transform_5, window_bounds = array<i64: 8, 16>}, {pipeline_mode = #tpu.pipeline_mode<synchronous>, transform_indices = @transform_6, window_bounds = array<i64: 8, 1>}, {pipeline_mode = #tpu.pipeline_mode<synchronous>, transform_indices = @transform_7, window_bounds = array<i64: 4, 8>}, {pipeline_mode = #tpu.pipeline_mode<synchronous>, transform_indices = @transform_8, window_bounds = array<i64: 4, 1>}, {transform_indices = @transform_9, window_bounds = array<i64: 4, 128>}]} {
    %c0 = arith.constant 0 : index
    %c0_0 = arith.constant 0 : index
    %0 = vector.load %arg1[%c0, %c0_0] : memref<128x16xf32, #tpu.memory_space<vmem>>, vector<128x16xf32>
    %c0_1 = arith.constant 0 : index
    %c0_2 = arith.constant 0 : index
    %1 = vector.load %arg2[%c0_1, %c0_2] : memref<32x16xf32, #tpu.memory_space<vmem>>, vector<32x16xf32>
    %cst = arith.constant dense<0.000000e+00> : vector<32x128xf32>
    %2 = tpu.matmul %1, %0, %cst {dimension_numbers = #tpu.dot_dimension_numbers<[1], [1], [0], [0], [0, 0, 1, 0], [], []>} : vector<32x16xf32>, vector<128x16xf32>, vector<32x128xf32> -> vector<32x128xf32>
    %c0_3 = arith.constant 0 : index
    %c0_4 = arith.constant 0 : index
    %3 = vector.load %arg3[%c0_3, %c0_4] : memref<32x1xf32, #tpu.memory_space<vmem>>, vector<32x1xf32>
    %4 = vector.broadcast %3 : vector<32x1xf32> to vector<32x128xf32>
    %5 = arith.addf %2, %4 : vector<32x128xf32>
    %cst_5 = arith.constant 0.000000e+00 : f32
    %6 = vector.broadcast %cst_5 : f32 to vector<32x128xf32>
    %7 = arith.maximumf %5, %6 : vector<32x128xf32>
    %c0_6 = arith.constant 0 : index
    %c0_7 = arith.constant 0 : index
    %8 = vector.load %arg4[%c0_6, %c0_7] : memref<16x32xf32, #tpu.memory_space<vmem>>, vector<16x32xf32>
    %cst_8 = arith.constant dense<0.000000e+00> : vector<16x128xf32>
    %9 = tpu.matmul %8, %7, %cst_8 {dimension_numbers = #tpu.dot_dimension_numbers<[1], [0], [0], [1], [0, 0, 1, 1], [], []>} : vector<16x32xf32>, vector<32x128xf32>, vector<16x128xf32> -> vector<16x128xf32>
    %c0_9 = arith.constant 0 : index
    %c0_10 = arith.constant 0 : index
    %10 = vector.load %arg5[%c0_9, %c0_10] : memref<16x1xf32, #tpu.memory_space<vmem>>, vector<16x1xf32>
    %11 = vector.broadcast %10 : vector<16x1xf32> to vector<16x128xf32>
    %12 = arith.addf %9, %11 : vector<16x128xf32>
    %cst_11 = arith.constant 0.000000e+00 : f32
    %13 = vector.broadcast %cst_11 : f32 to vector<16x128xf32>
    %14 = arith.maximumf %12, %13 : vector<16x128xf32>
    %c0_12 = arith.constant 0 : index
    %c0_13 = arith.constant 0 : index
    %15 = vector.load %arg6[%c0_12, %c0_13] : memref<8x16xf32, #tpu.memory_space<vmem>>, vector<8x16xf32>
    %cst_14 = arith.constant dense<0.000000e+00> : vector<8x128xf32>
    %16 = tpu.matmul %15, %14, %cst_14 {dimension_numbers = #tpu.dot_dimension_numbers<[1], [0], [0], [1], [0, 0, 1, 1], [], []>} : vector<8x16xf32>, vector<16x128xf32>, vector<8x128xf32> -> vector<8x128xf32>
    %c0_15 = arith.constant 0 : index
    %c0_16 = arith.constant 0 : index
    %17 = vector.load %arg7[%c0_15, %c0_16] : memref<8x1xf32, #tpu.memory_space<vmem>>, vector<8x1xf32>
    %18 = vector.broadcast %17 : vector<8x1xf32> to vector<8x128xf32>
    %19 = arith.addf %16, %18 : vector<8x128xf32>
    %cst_17 = arith.constant 0.000000e+00 : f32
    %20 = vector.broadcast %cst_17 : f32 to vector<8x128xf32>
    %21 = arith.maximumf %19, %20 : vector<8x128xf32>
    %c0_18 = arith.constant 0 : index
    %c0_19 = arith.constant 0 : index
    %22 = vector.load %arg8[%c0_18, %c0_19] : memref<4x8xf32, #tpu.memory_space<vmem>>, vector<4x8xf32>
    %cst_20 = arith.constant dense<0.000000e+00> : vector<4x128xf32>
    %23 = tpu.matmul %22, %21, %cst_20 {dimension_numbers = #tpu.dot_dimension_numbers<[1], [0], [0], [1], [0, 0, 1, 1], [], []>} : vector<4x8xf32>, vector<8x128xf32>, vector<4x128xf32> -> vector<4x128xf32>
    %c0_21 = arith.constant 0 : index
    %c0_22 = arith.constant 0 : index
    %24 = vector.load %arg9[%c0_21, %c0_22] : memref<4x1xf32, #tpu.memory_space<vmem>>, vector<4x1xf32>
    %25 = vector.broadcast %24 : vector<4x1xf32> to vector<4x128xf32>
    %26 = arith.addf %23, %25 : vector<4x128xf32>
    %c0_23 = arith.constant 0 : index
    %c0_24 = arith.constant 0 : index
    %27 = vector.load %arg10[%c0_23, %c0_24] : memref<4x128xf32, #tpu.memory_space<vmem>>, vector<4x128xf32>
    tpu.vector_store %arg10[%c0_23, %c0_24], %26 {strides = array<i32>} : memref<4x128xf32, #tpu.memory_space<vmem>>, vector<4x128xf32>,
    return
  }
  func.func @transform_0(%arg0: i32) -> (i32, i32) {
    %c0_i32 = arith.constant 0 : i32
    %c0_i32_0 = arith.constant 0 : i32
    return %arg0, %c0_i32 : i32, i32
  }
  func.func @transform_1(%arg0: i32) -> (i32, i32) {
    %c0_i32 = arith.constant 0 : i32
    %c0_i32_0 = arith.constant 0 : i32
    %c0_i32_1 = arith.constant 0 : i32
    return %c0_i32, %c0_i32_0 : i32, i32
  }
  func.func @transform_2(%arg0: i32) -> (i32, i32) {
    %c0_i32 = arith.constant 0 : i32
    %c0_i32_0 = arith.constant 0 : i32
    %c0_i32_1 = arith.constant 0 : i32
    return %c0_i32, %c0_i32_0 : i32, i32
  }
  func.func @transform_3(%arg0: i32) -> (i32, i32) {
    %c0_i32 = arith.constant 0 : i32
    %c0_i32_0 = arith.constant 0 : i32
    %c0_i32_1 = arith.constant 0 : i32
    return %c0_i32, %c0_i32_0 : i32, i32
  }
  func.func @transform_4(%arg0: i32) -> (i32, i32) {
    %c0_i32 = arith.constant 0 : i32
    %c0_i32_0 = arith.constant 0 : i32
    %c0_i32_1 = arith.constant 0 : i32
    return %c0_i32, %c0_i32_0 : i32, i32
  }
  func.func @transform_5(%arg0: i32) -> (i32, i32) {
    %c0_i32 = arith.constant 0 : i32
    %c0_i32_0 = arith.constant 0 : i32
    %c0_i32_1 = arith.constant 0 : i32
    return %c0_i32, %c0_i32_0 : i32, i32
  }
  func.func @transform_6(%arg0: i32) -> (i32, i32) {
    %c0_i32 = arith.constant 0 : i32
    %c0_i32_0 = arith.constant 0 : i32
    %c0_i32_1 = arith.constant 0 : i32
    return %c0_i32, %c0_i32_0 : i32, i32
  }
  func.func @transform_7(%arg0: i32) -> (i32, i32) {
    %c0_i32 = arith.constant 0 : i32
    %c0_i32_0 = arith.constant 0 : i32
    %c0_i32_1 = arith.constant 0 : i32
    return %c0_i32, %c0_i32_0 : i32, i32
  }
  func.func @transform_8(%arg0: i32) -> (i32, i32) {
    %c0_i32 = arith.constant 0 : i32
    %c0_i32_0 = arith.constant 0 : i32
    %c0_i32_1 = arith.constant 0 : i32
    return %c0_i32, %c0_i32_0 : i32, i32
  }
  func.func @transform_9(%arg0: i32) -> (i32, i32) {
    %c0_i32 = arith.constant 0 : i32
    %c0_i32_0 = arith.constant 0 : i32
    return %c0_i32, %arg0 : i32, i32
  }
}

</mosaic_0001>

<llo_original>
// kernel: _forward.1
$region0: #{_forward.1}
  #allocation0 [shape = 'u32[]', space=smem, size = 0x4, offset = 0x4, fixed_abs, tag = 'smem constant byte address 0x4 - core index']
  #allocation1 [shape = 'u32[144,128]{1,0:T(1,128)}', space=vmem, size = 0x12000, scoped, tag = 'internal scratch']
  %s0 = inlined_call_operand.vmem [shape: f32[8,16], index: 0, kind: input, shape index: {}]
  %s1 = inlined_call_operand.vmem [shape: f32[32,16], index: 1, kind: input, shape index: {}]
  %s2 = inlined_call_operand.vmem [shape: f32[32,1], index: 2, kind: input, shape index: {}]
  %s3 = inlined_call_operand.vmem [shape: f32[16,32], index: 3, kind: input, shape index: {}]
  %s4 = inlined_call_operand.vmem [shape: f32[16,1], index: 4, kind: input, shape index: {}]
  %s5 = inlined_call_operand.vmem [shape: f32[8,16], index: 5, kind: input, shape index: {}]
  %s6 = inlined_call_operand.vmem [shape: f32[8,1], index: 6, kind: input, shape index: {}]
  %s7 = inlined_call_operand.vmem [shape: f32[4,8], index: 7, kind: input, shape index: {}]
  %s8 = inlined_call_operand.vmem [shape: f32[4,1], index: 8, kind: input, shape index: {}]
  %s9 = inlined_call_operand.hbm [shape: f32[4,8], index: 9, kind: output, shape index: {}]
  %s10 = sld [smem:[#allocation0]]
  $region46: #{_forward.1} parent=0
    _
  %s12 = ssub.s32 1, %s10
  %s13 = scalar_select 0, %s12, %s10
  $region1: #{_forward.1} parent=0
    #allocation2 [shape = 'u8[2048]{0}', space=vmem, size = 0x800, scoped, tag = 'output window, operand 0, single buffered']
    #allocation3 [shape = 's32[1]{0}', space=sflag, size = 0x4, scoped, tag = 'scoped memory for _forward.1']
    %14 = vsyncpa [#allocation3], 0
    // Predicated region
    $region2: #{_forward.1} parent=1 // pred_check
      _
    $region3: #{_forward.1} parent=1 // pred_check_branch
      %16 = sbr.rel (0) target = $region5
    $region4: #{_forward.1} parent=1 // pred_region
      _
    $region5: #{_forward.1} parent=1 // pred_fallthru
      _
    // Predicated region
    $region6: #{_forward.1} parent=1 // pred_check
      _
    $region7: #{_forward.1} parent=1 // pred_check_branch
      %18 = sbr.rel (0) target = $region9
    $region8: #{_forward.1} parent=1 // pred_region
      _
    $region9: #{_forward.1} parent=1 // pred_fallthru
      _
    // Predicated region
    $region10: #{_forward.1} parent=1 // pred_check
      _
    $region11: #{_forward.1} parent=1 // pred_check_branch
      %20 = sbr.rel (0) target = $region13
    $region12: #{_forward.1} parent=1 // pred_region
      _
    $region13: #{_forward.1} parent=1 // pred_fallthru
      _
    // Predicated region
    $region14: #{_forward.1} parent=1 // pred_check
      _
    $region15: #{_forward.1} parent=1 // pred_check_branch
      %22 = sbr.rel (0) target = $region17
    $region16: #{_forward.1} parent=1 // pred_region
      _
    $region17: #{_forward.1} parent=1 // pred_fallthru
      _
    // Predicated region
    $region18: #{_forward.1} parent=1 // pred_check
      _
    $region19: #{_forward.1} parent=1 // pred_check_branch
      %24 = sbr.rel (0) target = $region21
    $region20: #{_forward.1} parent=1 // pred_region
      _
    $region21: #{_forward.1} parent=1 // pred_fallthru
      _
    // Predicated region
    $region22: #{_forward.1} parent=1 // pred_check
      _
    $region23: #{_forward.1} parent=1 // pred_check_branch
      %26 = sbr.rel (0) target = $region25
    $region24: #{_forward.1} parent=1 // pred_region
      _
    $region25: #{_forward.1} parent=1 // pred_fallthru
      _
    // Predicated region
    $region26: #{_forward.1} parent=1 // pred_check
      _
    $region27: #{_forward.1} parent=1 // pred_check_branch
      %28 = sbr.rel (0) target = $region29
    $region28: #{_forward.1} parent=1 // pred_region
      _
    $region29: #{_forward.1} parent=1 // pred_fallthru
      _
    // Predicated region
    $region30: #{_forward.1} parent=1 // pred_check
      _
    $region31: #{_forward.1} parent=1 // pred_check_branch
      %30 = sbr.rel (0) target = $region33
    $region32: #{_forward.1} parent=1 // pred_region
      _
    $region33: #{_forward.1} parent=1 // pred_fallthru
      _
    // Predicated region
    $region34: #{_forward.1} parent=1 // pred_check
      _
    $region35: #{_forward.1} parent=1 // pred_check_branch
      %32 = sbr.rel (0) target = $region37
    $region36: #{_forward.1} parent=1 // pred_region
      _
    $region37: #{_forward.1} parent=1 // pred_fallthru
      _
    %v33 = vld [vmem:[%s0] sm:$0xff]
    %v34 = vld [vmem:[%s0 + $0x8] sm:$0xff]
    %v35 = vld [vmem:[%s0 + $0x10] sm:$0xff]
    %v36 = vld [vmem:[%s0 + $0x18] sm:$0xff]
    %v37 = vld [vmem:[%s0 + $0x20] sm:$0xff]
    %v38 = vld [vmem:[%s0 + $0x28] sm:$0xff]
    %v39 = vld [vmem:[%s0 + $0x30] sm:$0xff]
    %v40 = vld [vmem:[%s0 + $0x38] sm:$0xff]
    %v41 = vld [vmem:[%s0 + $0x40] sm:$0xff]
    %v42 = vld [vmem:[%s0 + $0x48] sm:$0xff]
    %v43 = vld [vmem:[%s0 + $0x50] sm:$0xff]
    %v44 = vld [vmem:[%s0 + $0x58] sm:$0xff]
    %v45 = vld [vmem:[%s0 + $0x60] sm:$0xff]
    %v46 = vld [vmem:[%s0 + $0x68] sm:$0xff]
    %v47 = vld [vmem:[%s0 + $0x70] sm:$0xff]
    %v48 = vld [vmem:[%s0 + $0x78] sm:$0xff]
    %v49 = vld [vmem:[%s1] sm:$0xff]
    %v50 = vld [vmem:[%s1 + $0x8] sm:$0xff]
    %v51 = vld [vmem:[%s1 + $0x10] sm:$0xff]
    %v52 = vld [vmem:[%s1 + $0x18] sm:$0xff]
    %v53 = vld [vmem:[%s2] sm:$0xff]
    %v54 = vld [vmem:[%s2 + $0x8] sm:$0xff]
    %v55 = vld [vmem:[%s2 + $0x10] sm:$0xff]
    %v56 = vld [vmem:[%s2 + $0x18] sm:$0xff]
    %58 = vset.pattern.permute.xlu0 0
    %59 = vperm.xlu0 %58, %v53
    %v60 = vpop.permute.xlu0 %59
    %63 = vset.pattern.permute.xlu0 0
    %64 = vperm.xlu0 %63, %v54
    %v65 = vpop.permute.xlu0 %64
    %68 = vset.pattern.permute.xlu0 0
    %69 = vperm.xlu0 %68, %v55
    %v70 = vpop.permute.xlu0 %69
    %73 = vset.pattern.permute.xlu0 0
    %74 = vperm.xlu0 %73, %v56
    %v75 = vpop.permute.xlu0 %74
    %vm77 = vcmask 130048
    %v79 = vsel %vm77, %v49, 0
    %v82 = vsel %vm77, %v50, 0
    %v85 = vsel %vm77, %v51, 0
    %v88 = vsel %vm77, %v52, 0
    %v91 = vsel %vm77, %v33, 0
    %v94 = vsel %vm77, %v34, 0
    %v97 = vsel %vm77, %v35, 0
    %v100 = vsel %vm77, %v36, 0
    %v103 = vsel %vm77, %v37, 0
    %v106 = vsel %vm77, %v38, 0
    %v109 = vsel %vm77, %v39, 0
    %v112 = vsel %vm77, %v40, 0
    %v115 = vsel %vm77, %v41, 0
    %v118 = vsel %vm77, %v42, 0
    %v121 = vsel %vm77, %v43, 0
    %v124 = vsel %vm77, %v44, 0
    %v127 = vsel %vm77, %v45, 0
    %v130 = vsel %vm77, %v46, 0
    %v133 = vsel %vm77, %v47, 0
    %v136 = vsel %vm77, %v48, 0
    %138 = vmatprep.subr.mxu0 0.0
    %139 = vmatpush1.xpose.msra.mxu0 %v136
    %140 = vmatprep.subr.mxu0 0.0
    %141 = vmatpush1.xpose.msra.mxu0 %v133
    %142 = vmatprep.subr.mxu0 0.0
    %143 = vmatpush1.xpose.msra.mxu0 %v130
    %144 = vmatprep.subr.mxu0 0.0
    %145 = vmatpush1.xpose.msra.mxu0 %v127
    %146 = vmatprep.subr.mxu0 0.0
    %147 = vmatpush1.xpose.msra.mxu0 %v124
    %148 = vmatprep.subr.mxu0 0.0
    %149 = vmatpush1.xpose.msra.mxu0 %v121
    %150 = vmatprep.subr.mxu0 0.0
    %151 = vmatpush1.xpose.msra.mxu0 %v118
    %152 = vmatprep.subr.mxu0 0.0
    %153 = vmatpush1.xpose.msra.mxu0 %v115
    %154 = vmatprep.subr.mxu0 0.0
    %155 = vmatpush1.xpose.msra.mxu0 %v112
    %156 = vmatprep.subr.mxu0 0.0
    %157 = vmatpush1.xpose.msra.mxu0 %v109
    %158 = vmatprep.subr.mxu0 0.0
    %159 = vmatpush1.xpose.msra.mxu0 %v106
    %160 = vmatprep.subr.mxu0 0.0
    %161 = vmatpush1.xpose.msra.mxu0 %v103
    %162 = vmatprep.subr.mxu0 0.0
    %163 = vmatpush1.xpose.msra.mxu0 %v100
    %164 = vmatprep.subr.mxu0 0.0
    %165 = vmatpush1.xpose.msra.mxu0 %v97
    %166 = vmatprep.subr.mxu0 0.0
    %167 = vmatpush1.xpose.msra.mxu0 %v94
    %168 = vmatprep.subr.mxu0 0.0
    %169 = vmatpush1.xpose.msra.mxu0 %v91
    %170 = vmatprep.subr.mxu0 0.0
    %171 = vmatpush2.xpose.msra.mxu0 0.0
    %172 = vmatprep.subr.mxu0 0.0
    %173 = vmatpush2.xpose.msra.mxu0 0.0
    %174 = vmatprep.subr.mxu0 0.0
    %175 = vmatpush2.xpose.msra.mxu0 0.0
    %176 = vmatprep.subr.mxu0 0.0
    %177 = vmatpush2.xpose.msra.mxu0 0.0
    %178 = vmatprep.subr.mxu0 0.0
    %179 = vmatpush2.xpose.msra.mxu0 0.0
    %180 = vmatprep.subr.mxu0 0.0
    %181 = vmatpush2.xpose.msra.mxu0 0.0
    %182 = vmatprep.subr.mxu0 0.0
    %183 = vmatpush2.xpose.msra.mxu0 0.0
    %184 = vmatprep.subr.mxu0 0.0
    %185 = vmatpush2.xpose.msra.mxu0 0.0
    %186 = vmatprep.subr.mxu0 0.0
    %187 = vmatpush2.xpose.msra.mxu0 0.0
    %188 = vmatprep.subr.mxu0 0.0
    %189 = vmatpush2.xpose.msra.mxu0 0.0
    %190 = vmatprep.subr.mxu0 0.0
    %191 = vmatpush2.xpose.msra.mxu0 0.0
    %192 = vmatprep.subr.mxu0 0.0
    %193 = vmatpush2.xpose.msra.mxu0 0.0
    %194 = vmatprep.subr.mxu0 0.0
    %195 = vmatpush2.xpose.msra.mxu0 0.0
    %196 = vmatprep.subr.mxu0 0.0
    %197 = vmatpush2.xpose.msra.mxu0 0.0
    %198 = vmatprep.subr.mxu0 0.0
    %199 = vmatpush2.xpose.msra.mxu0 0.0
    %200 = vmatprep.subr.mxu0 0.0
    %201 = vmatpush2.xpose.msra.mxu0 0.0
    %202 = vmatprep.mubr.f32.mxu0 0.0
    %203 = vmatmul.mubr.f32.gmra.mxu0 %v79
    %v204 = vpop.f32.mrf.mxu0
    %v205 = vadd.f32 %v60, %v204
    %v206 = vpop.f32.mrf.mxu0
    %207 = vmatprep.mubr.f32.mxu0 0.0
    %208 = vmatmul.mubr.f32.gmra.mxu0 %v82
    %v209 = vpop.f32.mrf.mxu0
    %v210 = vadd.f32 %v65, %v209
    %v211 = vpop.f32.mrf.mxu0
    %212 = vmatprep.mubr.f32.mxu0 0.0
    %213 = vmatmul.mubr.f32.gmra.mxu0 %v85
    %v214 = vpop.f32.mrf.mxu0
    %v215 = vadd.f32 %v70, %v214
    %v216 = vpop.f32.mrf.mxu0
    %217 = vmatprep.mubr.f32.mxu0 0.0
    %218 = vmatmul.mubr.f32.gmra.mxu0 %v88
    %v219 = vpop.f32.mrf.mxu0
    %v220 = vadd.f32 %v75, %v219
    %v221 = vpop.f32.mrf.mxu0
    %222 = vdwg.mxu0
    %v223 = vmax.f32 %v205, 0.0
    %v224 = vmax.f32 %v210, 0.0
    %v225 = vmax.f32 %v215, 0.0
    %v226 = vmax.f32 %v220, 0.0
    %v227 = vld [vmem:[%s3] sm:$0xff]
    %v228 = vld [vmem:[%s3 + $0x8] sm:$0xff]
    %v229 = vld [vmem:[%s4] sm:$0xff]
    %v230 = vld [vmem:[%s4 + $0x8] sm:$0xff]
    %232 = vset.pattern.permute.xlu0 0
    %233 = vperm.xlu0 %232, %v229
    %v234 = vpop.permute.xlu0 %233
    %237 = vset.pattern.permute.xlu0 0
    %238 = vperm.xlu0 %237, %v230
    %v239 = vpop.permute.xlu0 %238
    %vm241 = vcmask 261120
    %v243 = vsel %vm241, %v227, 0
    %v246 = vsel %vm241, %v228, 0
    %248 = vmatprep.subr.mxu0 0.0
    %249 = vmatpush1.msra.mxu0 0.0
    %250 = vmatprep.subr.mxu0 0.0
    %251 = vmatpush1.msra.mxu0 0.0
    %252 = vmatprep.subr.mxu0 0.0
    %253 = vmatpush1.msra.mxu0 0.0
    %254 = vmatprep.subr.mxu0 0.0
    %255 = vmatpush1.msra.mxu0 0.0
    %256 = vmatprep.subr.mxu0 0.0
    %257 = vmatpush1.msra.mxu0 0.0
    %258 = vmatprep.subr.mxu0 0.0
    %259 = vmatpush1.msra.mxu0 0.0
    %260 = vmatprep.subr.mxu0 0.0
    %261 = vmatpush1.msra.mxu0 0.0
    %262 = vmatprep.subr.mxu0 0.0
    %263 = vmatpush1.msra.mxu0 0.0
    %264 = vmatprep.subr.mxu0 0.0
    %265 = vmatpush1.msra.mxu0 0.0
    %266 = vmatprep.subr.mxu0 0.0
    %267 = vmatpush1.msra.mxu0 0.0
    %268 = vmatprep.subr.mxu0 0.0
    %269 = vmatpush1.msra.mxu0 0.0
    %270 = vmatprep.subr.mxu0 0.0
    %271 = vmatpush1.msra.mxu0 0.0
    %272 = vmatprep.subr.mxu0 0.0
    %273 = vmatpush1.msra.mxu0 %v226
    %274 = vmatprep.subr.mxu0 0.0
    %275 = vmatpush1.msra.mxu0 %v225
    %276 = vmatprep.subr.mxu0 0.0
    %277 = vmatpush1.msra.mxu0 %v224
    %278 = vmatprep.subr.mxu0 0.0
    %279 = vmatpush1.msra.mxu0 %v223
    %280 = vmatprep.subr.mxu0 0.0
    %281 = vmatpush2.msra.mxu0 0.0
    %282 = vmatprep.subr.mxu0 0.0
    %283 = vmatpush2.msra.mxu0 0.0
    %284 = vmatprep.subr.mxu0 0.0
    %285 = vmatpush2.msra.mxu0 0.0
    %286 = vmatprep.subr.mxu0 0.0
    %287 = vmatpush2.msra.mxu0 0.0
    %288 = vmatprep.subr.mxu0 0.0
    %289 = vmatpush2.msra.mxu0 0.0
    %290 = vmatprep.subr.mxu0 0.0
    %291 = vmatpush2.msra.mxu0 0.0
    %292 = vmatprep.subr.mxu0 0.0
    %293 = vmatpush2.msra.mxu0 0.0
    %294 = vmatprep.subr.mxu0 0.0
    %295 = vmatpush2.msra.mxu0 0.0
    %296 = vmatprep.subr.mxu0 0.0
    %297 = vmatpush2.msra.mxu0 0.0
    %298 = vmatprep.subr.mxu0 0.0
    %299 = vmatpush2.msra.mxu0 0.0
    %300 = vmatprep.subr.mxu0 0.0
    %301 = vmatpush2.msra.mxu0 0.0
    %302 = vmatprep.subr.mxu0 0.0
    %303 = vmatpush2.msra.mxu0 0.0
    %304 = vmatprep.subr.mxu0 0.0
    %305 = vmatpush2.msra.mxu0 0.0
    %306 = vmatprep.subr.mxu0 0.0
    %307 = vmatpush2.msra.mxu0 0.0
    %308 = vmatprep.subr.mxu0 0.0
    %309 = vmatpush2.msra.mxu0 0.0
    %310 = vmatprep.subr.mxu0 0.0
    %311 = vmatpush2.msra.mxu0 0.0
    %312 = vmatprep.mubr.f32.mxu0 0.0
    %313 = vmatmul.mubr.f32.gmra.mxu0 %v243
    %v314 = vpop.f32.mrf.mxu0
    %v315 = vadd.f32 %v234, %v314
    %v316 = vpop.f32.mrf.mxu0
    %317 = vmatprep.mubr.f32.mxu0 0.0
    %318 = vmatmul.mubr.f32.gmra.mxu0 %v246
    %v319 = vpop.f32.mrf.mxu0
    %v320 = vadd.f32 %v239, %v319
    %v321 = vpop.f32.mrf.mxu0
    %322 = vdwg.mxu0
    %v323 = vmax.f32 %v315, 0.0
    %v324 = vmax.f32 %v320, 0.0
    %v325 = vld [vmem:[%s5] sm:$0xff]
    %v326 = vld [vmem:[%s6] sm:$0xff]
    %328 = vset.pattern.permute.xlu0 0
    %329 = vperm.xlu0 %328, %v326
    %v330 = vpop.permute.xlu0 %329
    %v333 = vsel %vm77, %v325, 0
    %335 = vmatprep.subr.mxu0 0.0
    %336 = vmatpush1.msra.mxu0 0.0
    %337 = vmatprep.subr.mxu0 0.0
    %338 = vmatpush1.msra.mxu0 0.0
    %339 = vmatprep.subr.mxu0 0.0
    %340 = vmatpush1.msra.mxu0 0.0
    %341 = vmatprep.subr.mxu0 0.0
    %342 = vmatpush1.msra.mxu0 0.0
    %343 = vmatprep.subr.mxu0 0.0
    %344 = vmatpush1.msra.mxu0 0.0
    %345 = vmatprep.subr.mxu0 0.0
    %346 = vmatpush1.msra.mxu0 0.0
    %347 = vmatprep.subr.mxu0 0.0
    %348 = vmatpush1.msra.mxu0 0.0
    %349 = vmatprep.subr.mxu0 0.0
    %350 = vmatpush1.msra.mxu0 0.0
    %351 = vmatprep.subr.mxu0 0.0
    %352 = vmatpush1.msra.mxu0 0.0
    %353 = vmatprep.subr.mxu0 0.0
    %354 = vmatpush1.msra.mxu0 0.0
    %355 = vmatprep.subr.mxu0 0.0
    %356 = vmatpush1.msra.mxu0 0.0
    %357 = vmatprep.subr.mxu0 0.0
    %358 = vmatpush1.msra.mxu0 0.0
    %359 = vmatprep.subr.mxu0 0.0
    %360 = vmatpush1.msra.mxu0 0.0
    %361 = vmatprep.subr.mxu0 0.0
    %362 = vmatpush1.msra.mxu0 0.0
    %363 = vmatprep.subr.mxu0 0.0
    %364 = vmatpush1.msra.mxu0 %v324
    %365 = vmatprep.subr.mxu0 0.0
    %366 = vmatpush1.msra.mxu0 %v323
    %367 = vmatprep.subr.mxu0 0.0
    %368 = vmatpush2.msra.mxu0 0.0
    %369 = vmatprep.subr.mxu0 0.0
    %370 = vmatpush2.msra.mxu0 0.0
    %371 = vmatprep.subr.mxu0 0.0
    %372 = vmatpush2.msra.mxu0 0.0
    %373 = vmatprep.subr.mxu0 0.0
    %374 = vmatpush2.msra.mxu0 0.0
    %375 = vmatprep.subr.mxu0 0.0
    %376 = vmatpush2.msra.mxu0 0.0
    %377 = vmatprep.subr.mxu0 0.0
    %378 = vmatpush2.msra.mxu0 0.0
    %379 = vmatprep.subr.mxu0 0.0
    %380 = vmatpush2.msra.mxu0 0.0
    %381 = vmatprep.subr.mxu0 0.0
    %382 = vmatpush2.msra.mxu0 0.0
    %383 = vmatprep.subr.mxu0 0.0
    %384 = vmatpush2.msra.mxu0 0.0
    %385 = vmatprep.subr.mxu0 0.0
    %386 = vmatpush2.msra.mxu0 0.0
    %387 = vmatprep.subr.mxu0 0.0
    %388 = vmatpush2.msra.mxu0 0.0
    %389 = vmatprep.subr.mxu0 0.0
    %390 = vmatpush2.msra.mxu0 0.0
    %391 = vmatprep.subr.mxu0 0.0
    %392 = vmatpush2.msra.mxu0 0.0
    %393 = vmatprep.subr.mxu0 0.0
    %394 = vmatpush2.msra.mxu0 0.0
    %395 = vmatprep.subr.mxu0 0.0
    %396 = vmatpush2.msra.mxu0 0.0
    %397 = vmatprep.subr.mxu0 0.0
    %398 = vmatpush2.msra.mxu0 0.0
    %399 = vmatprep.mubr.f32.mxu0 0.0
    %400 = vmatmul.mubr.f32.gmra.mxu0 %v333
    %v401 = vpop.f32.mrf.mxu0
    %v402 = vadd.f32 %v330, %v401
    %v403 = vpop.f32.mrf.mxu0
    %404 = vdwg.mxu0
    %v405 = vmax.f32 %v402, 0.0
    %v406 = vld [vmem:[%s7] sm:$0xf]
    %v407 = vld [vmem:[%s8] sm:$0xf]
    %409 = vset.pattern.permute.xlu0 0
    %410 = vperm.xlu0 %409, %v407
    %v411 = vpop.permute.xlu0 %410
    %vm413 = vcmask 64512
    %v415 = vsel %vm413, %v406, 0
    %417 = vmatprep.subr.mxu0 0.0
    %418 = vmatpush1.msra.mxu0 0.0
    %419 = vmatprep.subr.mxu0 0.0
    %420 = vmatpush1.msra.mxu0 0.0
    %421 = vmatprep.subr.mxu0 0.0
    %422 = vmatpush1.msra.mxu0 0.0
    %423 = vmatprep.subr.mxu0 0.0
    %424 = vmatpush1.msra.mxu0 0.0
    %425 = vmatprep.subr.mxu0 0.0
    %426 = vmatpush1.msra.mxu0 0.0
    %427 = vmatprep.subr.mxu0 0.0
    %428 = vmatpush1.msra.mxu0 0.0
    %429 = vmatprep.subr.mxu0 0.0
    %430 = vmatpush1.msra.mxu0 0.0
    %431 = vmatprep.subr.mxu0 0.0
    %432 = vmatpush1.msra.mxu0 0.0
    %433 = vmatprep.subr.mxu0 0.0
    %434 = vmatpush1.msra.mxu0 0.0
    %435 = vmatprep.subr.mxu0 0.0
    %436 = vmatpush1.msra.mxu0 0.0
    %437 = vmatprep.subr.mxu0 0.0
    %438 = vmatpush1.msra.mxu0 0.0
    %439 = vmatprep.subr.mxu0 0.0
    %440 = vmatpush1.msra.mxu0 0.0
    %441 = vmatprep.subr.mxu0 0.0
    %442 = vmatpush1.msra.mxu0 0.0
    %443 = vmatprep.subr.mxu0 0.0
    %444 = vmatpush1.msra.mxu0 0.0
    %445 = vmatprep.subr.mxu0 0.0
    %446 = vmatpush1.msra.mxu0 0.0
    %447 = vmatprep.subr.mxu0 0.0
    %448 = vmatpush1.msra.mxu0 %v405
    %449 = vmatprep.subr.mxu0 0.0
    %450 = vmatpush2.msra.mxu0 0.0
    %451 = vmatprep.subr.mxu0 0.0
    %452 = vmatpush2.msra.mxu0 0.0
    %453 = vmatprep.subr.mxu0 0.0
    %454 = vmatpush2.msra.mxu0 0.0
    %455 = vmatprep.subr.mxu0 0.0
    %456 = vmatpush2.msra.mxu0 0.0
    %457 = vmatprep.subr.mxu0 0.0
    %458 = vmatpush2.msra.mxu0 0.0
    %459 = vmatprep.subr.mxu0 0.0
    %460 = vmatpush2.msra.mxu0 0.0
    %461 = vmatprep.subr.mxu0 0.0
    %462 = vmatpush2.msra.mxu0 0.0
    %463 = vmatprep.subr.mxu0 0.0
    %464 = vmatpush2.msra.mxu0 0.0
    %465 = vmatprep.subr.mxu0 0.0
    %466 = vmatpush2.msra.mxu0 0.0
    %467 = vmatprep.subr.mxu0 0.0
    %468 = vmatpush2.msra.mxu0 0.0
    %469 = vmatprep.subr.mxu0 0.0
    %470 = vmatpush2.msra.mxu0 0.0
    %471 = vmatprep.subr.mxu0 0.0
    %472 = vmatpush2.msra.mxu0 0.0
    %473 = vmatprep.subr.mxu0 0.0
    %474 = vmatpush2.msra.mxu0 0.0
    %475 = vmatprep.subr.mxu0 0.0
    %476 = vmatpush2.msra.mxu0 0.0
    %477 = vmatprep.subr.mxu0 0.0
    %478 = vmatpush2.msra.mxu0 0.0
    %479 = vmatprep.subr.mxu0 0.0
    %480 = vmatpush2.msra.mxu0 0.0
    %481 = vmatprep.mubr.f32.mxu0 0.0
    %482 = vmatmul.mubr.f32.gmra.mxu0 %v415
    %v483 = vpop.f32.mrf.mxu0
    %v484 = vadd.f32 %v411, %v483
    %v485 = vpop.f32.mrf.mxu0
    %486 = vdwg.mxu0
    %487 = vst [vmem:[#allocation2] sm:$0xf] %v484
    // Predicated region
    $region38: #{_forward.1} parent=1 // pred_check
      _
    $region39: #{_forward.1} parent=1 // pred_check_branch
      %489 = sbr.rel (0) target = $region41
    $region40: #{_forward.1} parent=1 // pred_region
      %s491 = ssub.s32 64, 64
      %492 = vsyncadd [#allocation3], %s491
      %s494 = sshll.u32 [#allocation2], 4
      %s495 = int_to_ptr.vmem [resolvable:$true] %s494
      %497 = dma.vmem_to_hbm [thread:$0]  %s495, 64, %s9, [#allocation3]
    $region41: #{_forward.1} parent=1 // pred_fallthru
      _
    // Predicated region
    $region42: #{_forward.1} parent=1 // pred_check
      _
    $region43: #{_forward.1} parent=1 // pred_check_branch
      %499 = sbr.rel (0) target = $region45
    $region44: #{_forward.1} parent=1 // pred_region
      %500 = dma.done [#allocation3], 64
    $region45: #{_forward.1} parent=1 // pred_fallthru
      _
    %501 = vsyncpa [#allocation3], 1

</llo_original>
